<compile_context>
chip_gen: v6e
topology: v6e:2x2x1
jax: 0.10.0
libtpu: 0.0.40
codegen_flags: <defaults>
</compile_context>

<pallas_src>
import jax
import jax.numpy as jnp
from jax.experimental import pallas as pl
from jax.experimental.pallas import tpu as pltpu


def kway_cross_entropy(logits, target, reduction="mean", tile_n=2048):
    """logits: (N, K) positive probabilities; target: (N, K, K) one-hot (float)."""
    N, K = logits.shape
    assert target.shape == (N, K, K), "target must have shape (N, K, K)"

    # Lane-dense 2D view of the target: (N, K*K), contiguous rows for DMA.
    target2d = target.reshape(N, K * K)

    # Row tile: multiple of 8 sublanes; keep double-buffered input blocks well
    # under the smallest (v5e) default scoped-VMEM budget.
    bytes_per_row = 4 * (K + K * K)                      # f32 logits row + target row
    vmem_budget = 8 * 1024 * 1024                        # conservative (v5e scoped default = 16 MiB)
    max_tile = max(8, ((vmem_budget // (2 * bytes_per_row)) // 8) * 8)
    tile_n = max(8, min(int(tile_n), max_tile))
    tile_n = (tile_n // 8) * 8

    n_pad = pl.cdiv(N, tile_n) * tile_n
    if n_pad != N:
        pad = n_pad - N
        # log(1) = 0 and zero targets => padded rows contribute exactly 0.
        logits = jnp.concatenate(
            [logits, jnp.ones((pad, K), dtype=logits.dtype)], axis=0)
        target2d = jnp.concatenate(
            [target2d, jnp.zeros((pad, K * K), dtype=target2d.dtype)], axis=0)

    num_tiles = n_pad // tile_n
    scale = (1.0 / N) if reduction == "mean" else 1.0    # compile-time constant

    def kernel(logits_ref, target_ref, out_ref, acc_ref):
        i = pl.program_id(0)

        @pl.when(i == 0)
        def _():
            acc_ref[...] = jnp.zeros_like(acc_ref)

        logp = jnp.log(logits_ref[...].astype(jnp.float32))      # (T, K)
        t2 = target_ref[...].astype(jnp.float32)                 # (T, K*K)

        # sum_k target[:, k, :] via unrolled static lane slices -> (T, K)
        t_sum = t2[:, 0:K]
        for k in range(1, K):
            t_sum = t_sum + t2[:, k * K:(k + 1) * K]

        # partial sum of log-likelihoods for this row tile, accumulated in f32
        acc_ref[...] += jnp.sum(t_sum * logp, keepdims=True)     # (1, 1)

        # output block is resident across the whole grid; store once at the end
        @pl.when(i == pl.num_programs(0) - 1)
        def _():
            out_ref[...] = (-acc_ref[...] * scale).astype(out_ref.dtype)

    out = pl.pallas_call(
        kernel,
        out_shape=jax.ShapeDtypeStruct((1, 1), jnp.float32),
        grid=(num_tiles,),
        in_specs=[
            pl.BlockSpec((tile_n, K), lambda i: (i, 0)),
            pl.BlockSpec((tile_n, K * K), lambda i: (i, 0)),
        ],
        out_specs=pl.BlockSpec((1, 1), lambda i: (0, 0)),
        scratch_shapes=[pltpu.VMEM((1, 1), jnp.float32)],
        compiler_params=pltpu.CompilerParams(
            # single grid axis carries the scalar accumulator -> reduction axis
            dimension_semantics=("arbitrary",),
        ),
    )(logits, target2d)

    return out[0, 0]


if __name__ == "__main__":
    key = jax.random.PRNGKey(0)
    N, K = 100, 8                                # small shapes: (N, K) / (N, K, K)
    k1, k2 = jax.random.split(key)

    # logits are probabilities (the module takes log() directly) -> softmax
    logits = jax.nn.softmax(
        jax.random.normal(k1, (N, K), dtype=jnp.float32), axis=-1)
    # (N, K, K) one-hot target
    cls = jax.random.randint(k2, (N, K), 0, K)
    target = jax.nn.one_hot(cls, K, dtype=jnp.float32)

    # Pure-JAX reference (mirrors the PyTorch module)
    logp = jnp.log(logits)
    ll = jnp.sum(target * logp[:, None, :], axis=(1, 2))
    ref_mean = -jnp.mean(ll)
    ref_sum = -jnp.sum(ll)

    # tile_n=16 exercises multiple grid steps + tail padding (100 -> 112)
    loss_mean = kway_cross_entropy(logits, target, reduction="mean", tile_n=16)
    jax.block_until_ready(loss_mean)
    loss_sum = kway_cross_entropy(logits, target, reduction="sum", tile_n=16)
    jax.block_until_ready(loss_sum)
    # default (large) tile exercises the single-tile path (init + finalize same step)
    loss_mean_1tile = kway_cross_entropy(logits, target, reduction="mean")
    jax.block_until_ready(loss_mean_1tile)

    assert loss_mean.shape == ()
    assert jnp.allclose(loss_mean, ref_mean, rtol=1e-5, atol=1e-5), "mean mismatch"
    assert jnp.allclose(loss_sum, ref_sum, rtol=1e-5, atol=1e-4), "sum mismatch"
    assert jnp.allclose(loss_mean_1tile, ref_mean, rtol=1e-5, atol=1e-5), "single-tile mismatch"

    print("KERNEL_OK")
</pallas_src>

<mosaic_0001>
module attributes {stable_mosaic.version = 11 : i64} {
  func.func @kernel(%arg0: i32, %arg1: memref<16x8xf32, #tpu.memory_space<vmem>>, %arg2: memref<16x64xf32, #tpu.memory_space<vmem>>, %arg3: memref<1x1xf32, #tpu.memory_space<vmem>>, %arg4: memref<1x1xf32, #tpu.memory_space<vmem>>) attributes {dimension_semantics = [#tpu.dimension_semantics<arbitrary>], iteration_bounds = array<i64: 7>, scalar_prefetch = 0 : i64, scratch_operands = 1 : i64, tpu.core_type = #tpu.core_type<tc>, window_params = [{transform_indices = @transform_0, window_bounds = array<i64: 16, 8>}, {transform_indices = @transform_1, window_bounds = array<i64: 16, 64>}, {pipeline_mode = #tpu.pipeline_mode<synchronous>, transform_indices = @transform_2, window_bounds = array<i64: 1, 1>}]} {
    %c0_i32 = arith.constant 0 : i32
    %0 = arith.cmpi eq, %arg0, %c0_i32 : i32
    %1 = arith.extui %0 : i1 to i32
    %c0_i32_0 = arith.constant 0 : i32
    %2 = arith.cmpi ne, %1, %c0_i32_0 : i32
    scf.if %2 {
      %cst_9 = arith.constant 0.000000e+00 : f32
      %33 = vector.broadcast %cst_9 : f32 to vector<1x1xf32>
      %c0_10 = arith.constant 0 : index
      %c0_11 = arith.constant 0 : index
      %34 = vector.load %arg4[%c0_10, %c0_11] : memref<1x1xf32, #tpu.memory_space<vmem>>, vector<1x1xf32>
      tpu.vector_store %arg4[%c0_10, %c0_11], %33 {strides = array<i32>} : memref<1x1xf32, #tpu.memory_space<vmem>>, vector<1x1xf32>,
    } else {
    }
    %c0 = arith.constant 0 : index
    %c0_1 = arith.constant 0 : index
    %3 = vector.load %arg1[%c0, %c0_1] : memref<16x8xf32, #tpu.memory_space<vmem>>, vector<16x8xf32>
    %4 = math.log %3 : vector<16x8xf32>
    %c0_2 = arith.constant 0 : index
    %c0_3 = arith.constant 0 : index
    %5 = vector.load %arg2[%c0_2, %c0_3] : memref<16x64xf32, #tpu.memory_space<vmem>>, vector<16x64xf32>
    %6 = vector.extract_strided_slice %5 {offsets = [0, 0], sizes = [16, 8], strides = [1, 1]} : vector<16x64xf32> to vector<16x8xf32>
    %7 = vector.extract_strided_slice %5 {offsets = [0, 8], sizes = [16, 8], strides = [1, 1]} : vector<16x64xf32> to vector<16x8xf32>
    %8 = arith.addf %6, %7 : vector<16x8xf32>
    %9 = vector.extract_strided_slice %5 {offsets = [0, 16], sizes = [16, 8], strides = [1, 1]} : vector<16x64xf32> to vector<16x8xf32>
    %10 = arith.addf %8, %9 : vector<16x8xf32>
    %11 = vector.extract_strided_slice %5 {offsets = [0, 24], sizes = [16, 8], strides = [1, 1]} : vector<16x64xf32> to vector<16x8xf32>
    %12 = arith.addf %10, %11 : vector<16x8xf32>
    %13 = vector.extract_strided_slice %5 {offsets = [0, 32], sizes = [16, 8], strides = [1, 1]} : vector<16x64xf32> to vector<16x8xf32>
    %14 = arith.addf %12, %13 : vector<16x8xf32>
    %15 = vector.extract_strided_slice %5 {offsets = [0, 40], sizes = [16, 8], strides = [1, 1]} : vector<16x64xf32> to vector<16x8xf32>
    %16 = arith.addf %14, %15 : vector<16x8xf32>
    %17 = vector.extract_strided_slice %5 {offsets = [0, 48], sizes = [16, 8], strides = [1, 1]} : vector<16x64xf32> to vector<16x8xf32>
    %18 = arith.addf %16, %17 : vector<16x8xf32>
    %19 = vector.extract_strided_slice %5 {offsets = [0, 56], sizes = [16, 8], strides = [1, 1]} : vector<16x64xf32> to vector<16x8xf32>
    %20 = arith.addf %18, %19 : vector<16x8xf32>
    %c0_4 = arith.constant 0 : index
    %c0_5 = arith.constant 0 : index
    %21 = vector.load %arg4[%c0_4, %c0_5] : memref<1x1xf32, #tpu.memory_space<vmem>>, vector<1x1xf32>
    %22 = arith.mulf %20, %4 : vector<16x8xf32>
    %23 = vector.shape_cast %22 : vector<16x8xf32> to vector<1x16x8xf32>
    %cst = arith.constant dense<0.000000e+00> : vector<1xf32>
    %24 = vector.multi_reduction <add>, %23, %cst [1, 2] : vector<1x16x8xf32> to vector<1xf32>
    %25 = vector.shape_cast %24 : vector<1xf32> to vector<1x1x1xf32>
    %26 = vector.extract %25[0, 0, 0] : f32 from vector<1x1x1xf32>
    %27 = vector.broadcast %26 : f32 to vector<1x1xf32>
    %28 = arith.addf %21, %27 : vector<1x1xf32>
    %c0_6 = arith.constant 0 : index
    %c0_7 = arith.constant 0 : index
    %29 = vector.load %arg4[%c0_6, %c0_7] : memref<1x1xf32, #tpu.memory_space<vmem>>, vector<1x1xf32>
    tpu.vector_store %arg4[%c0_6, %c0_7], %28 {strides = array<i32>} : memref<1x1xf32, #tpu.memory_space<vmem>>, vector<1x1xf32>,
    %c6_i32 = arith.constant 6 : i32
    %30 = arith.cmpi eq, %arg0, %c6_i32 : i32
    %31 = arith.extui %30 : i1 to i32
    %c0_i32_8 = arith.constant 0 : i32
    %32 = arith.cmpi ne, %31, %c0_i32_8 : i32
    scf.if %32 {
      %c0_9 = arith.constant 0 : index
      %c0_10 = arith.constant 0 : index
      %33 = vector.load %arg4[%c0_9, %c0_10] : memref<1x1xf32, #tpu.memory_space<vmem>>, vector<1x1xf32>
      %cst_11 = arith.constant 0.000000e+00 : f32
      %34 = vector.broadcast %cst_11 : f32 to vector<1x1xf32>
      %35 = arith.subf %34, %33 : vector<1x1xf32>
      %cst_12 = arith.constant 0.00999999977 : f32
      %36 = vector.broadcast %cst_12 : f32 to vector<1x1xf32>
      %37 = arith.mulf %35, %36 : vector<1x1xf32>
      %c0_13 = arith.constant 0 : index
      %c0_14 = arith.constant 0 : index
      %38 = vector.load %arg3[%c0_13, %c0_14] : memref<1x1xf32, #tpu.memory_space<vmem>>, vector<1x1xf32>
      tpu.vector_store %arg3[%c0_13, %c0_14], %37 {strides = array<i32>} : memref<1x1xf32, #tpu.memory_space<vmem>>, vector<1x1xf32>,
    } else {
    }
    return
  }
  func.func @transform_0(%arg0: i32) -> (i32, i32) {
    %c0_i32 = arith.constant 0 : i32
    %c0_i32_0 = arith.constant 0 : i32
    return %arg0, %c0_i32 : i32, i32
  }
  func.func @transform_1(%arg0: i32) -> (i32, i32) {
    %c0_i32 = arith.constant 0 : i32
    %c0_i32_0 = arith.constant 0 : i32
    return %arg0, %c0_i32 : i32, i32
  }
  func.func @transform_2(%arg0: i32) -> (i32, i32) {
    %c0_i32 = arith.constant 0 : i32
    %c0_i32_0 = arith.constant 0 : i32
    %c0_i32_1 = arith.constant 0 : i32
    return %c0_i32, %c0_i32_0 : i32, i32
  }
}

</mosaic_0001>

<llo_original>
// kernel: tpu_custom_call.1
$region0: #{tpu_custom_call.1}
  #allocation0 [shape = 'u32[]', space=smem, size = 0x4, offset = 0x4, fixed_abs, tag = 'smem constant byte address 0x4 - core index']
  #allocation1 [shape = 'u32[144,128]{1,0:T(1,128)}', space=vmem, size = 0x12000, scoped, tag = 'internal scratch']
  #allocation2 [shape = 'f32[1,1]{1,0:T(1,128)}', space=vmem, size = 0x200, scoped, tag = 'scratch operand']
  %s0 = inlined_call_operand.vmem [shape: f32[112,8], index: 0, kind: input, shape index: {}]
  %s1 = inlined_call_operand.vmem [shape: f32[112,64], index: 1, kind: input, shape index: {}]
  %s2 = inlined_call_operand.hbm [shape: f32[1,1], index: 2, kind: output, shape index: {}]
  %s3 = sld [smem:[#allocation0]]
  $region49: #{tpu_custom_call.1} parent=0
    _
  %s5 = ssub.s32 1, %s3
  %s6 = scalar_select 0, %s5, %s3
  $region1: #{tpu_custom_call.1} parent=0
    #allocation3 [shape = 'u8[512]{0}', space=vmem, size = 0x400, scoped, tag = 'output window, operand 0, single buffered']
    #allocation4 [shape = 's32[2]{0}', space=sflag, size = 0x8, scoped, tag = 'scoped memory for tpu_custom_call.1']
    %7 = vsyncpa [#allocation4], 0
    loop: start=0, step=1, limit=9
    $region2: #{tpu_custom_call.1} parent=1 // loop_pre_header
      _
    $region3: #{tpu_custom_call.1} parent=1 // loop_header
      %s9 = sphi 0, %s13
      %p10 = scmp.ge.s32.totalorder %s9, 9
      %s19 = sphi 0, %s21
      %s22 = sphi 0, %s19
      %s23 = sphi 0, %s22
      %s39 = sphi 0, %s23
      %s45 = sphi 0, %s47
      %s48 = sphi 0, %s45
      %s49 = sphi 0, %s48
      %s65 = sphi 0, %s49
      %s69 = sphi 0, %s69
      %s71 = sphi 0, %s69
      %s72 = sphi 0, %s71
      %s86 = sphi 0, %s72
    $region4: #{tpu_custom_call.1} parent=1 // loop_header_branch
      %12 = sbr.rel (%p10) target = $region8
    $region5: #{tpu_custom_call.1} parent=1 // loop_body
      %s14 = ssub.s32 %s9, 1
      %s15 = ssub.s32 %s9, 2
      %s16 = sadd.s32 %s9, 1
      %s17 = ssub.s32 %s9, %s16
      %p18 = scmp.eq.s32.totalorder %s17, 0
      %s20 = sadd.s32 %s19, 1
      %s21 = scalar_select %p18, %s19, %s20
      %p24 = pneg %p18
      %p25 = scmp.eq.s32.totalorder %s9, 6
      %p26 = por %p24, %p25
      %p27 = scmp.ne.s32.totalorder %s19, %s22
      %p28 = scmp.eq.s32.totalorder %s9, 0
      %p29 = por %p27, %p28
      %p30 = scmp.ne.s32.totalorder %s19, %s22
      %p31 = scmp.eq.s32.totalorder %s14, 6
      %p32 = por %p30, %p31
      %p33 = scmp.ne.s32.totalorder %s22, %s23
      %p34 = scmp.eq.s32.totalorder %s14, 0
      %p35 = por %p33, %p34
      %p36 = scmp.ne.s32.totalorder %s22, %s23
      %p37 = scmp.eq.s32.totalorder %s15, 6
      %p38 = por %p36, %p37
      %p40 = scmp.ne.s32.totalorder %s23, %s39
      %p41 = scmp.eq.s32.totalorder %s15, 0
      %p42 = por %p40, %p41
      %s43 = ssub.s32 %s9, %s16
      %p44 = scmp.eq.s32.totalorder %s43, 0
      %s46 = sadd.s32 %s45, 1
      %s47 = scalar_select %p44, %s45, %s46
      %p50 = pneg %p44
      %p51 = scmp.eq.s32.totalorder %s9, 6
      %p52 = por %p50, %p51
      %p53 = scmp.ne.s32.totalorder %s45, %s48
      %p54 = scmp.eq.s32.totalorder %s9, 0
      %p55 = por %p53, %p54
      %p56 = scmp.ne.s32.totalorder %s45, %s48
      %p57 = scmp.eq.s32.totalorder %s14, 6
      %p58 = por %p56, %p57
      %p59 = scmp.ne.s32.totalorder %s48, %s49
      %p60 = scmp.eq.s32.totalorder %s14, 0
      %p61 = por %p59, %p60
      %p62 = scmp.ne.s32.totalorder %s48, %s49
      %p63 = scmp.eq.s32.totalorder %s15, 6
      %p64 = por %p62, %p63
      %p66 = scmp.ne.s32.totalorder %s49, %s65
      %p67 = scmp.eq.s32.totalorder %s15, 0
      %p68 = por %p66, %p67
      %s70 = sadd.s32 %s69, 1
      %p73 = scmp.eq.s32.totalorder %s9, 6
      %p74 = scmp.ne.s32.totalorder %s69, %s71
      %p75 = scmp.eq.s32.totalorder %s9, 0
      %p76 = por %p74, %p75
      %p77 = scmp.ne.s32.totalorder %s69, %s71
      %p78 = scmp.eq.s32.totalorder %s14, 6
      %p79 = por %p77, %p78
      %p80 = scmp.ne.s32.totalorder %s71, %s72
      %p81 = scmp.eq.s32.totalorder %s14, 0
      %p82 = por %p80, %p81
      %p83 = scmp.ne.s32.totalorder %s71, %s72
      %p84 = scmp.eq.s32.totalorder %s15, 6
      %p85 = por %p83, %p84
      %p87 = scmp.ne.s32.totalorder %s72, %s86
      %p88 = scmp.eq.s32.totalorder %s15, 0
      %p89 = por %p87, %p88
      %p90 = scmp.le.s32.totalorder 1, %s9
      %p91 = scmp.lt.s32.totalorder %s9, 8
      %p92 = pnand %p90, %p91
      %p93 = pneg %p92
      // Predicated region
      $region9: #{tpu_custom_call.1} parent=5 // pred_check
        _
      $region10: #{tpu_custom_call.1} parent=5 // pred_check_branch
        %95 = sbr.rel (%p92) target = $region12
      $region11: #{tpu_custom_call.1} parent=5 // pred_region
        %s96 = ssub.s32 %s9, 1
      $region12: #{tpu_custom_call.1} parent=5 // pred_fallthru
        _
      %p97 = scmp.lt.s32.totalorder %s9, 7
      // Predicated region
      $region13: #{tpu_custom_call.1} parent=5 // pred_check
        %p98 = pneg %p97
      $region14: #{tpu_custom_call.1} parent=5 // pred_check_branch
        %100 = sbr.rel (%p98) target = $region16
      $region15: #{tpu_custom_call.1} parent=5 // pred_region
        // Predicated region
        $region17: #{tpu_custom_call.1} parent=15 // pred_check
          %p101 = pneg %p29
        $region18: #{tpu_custom_call.1} parent=15 // pred_check_branch
          %103 = sbr.rel (%p101) target = $region20
        $region19: #{tpu_custom_call.1} parent=15 // pred_region
          %s104 = smul.u32 2, %s9
          %p105 = scmp.lt.s32.totalorder %s104, 13
          %s106 = scalar_select %p105, %s104, 13
          %s107 = smul.addr %s106, 8
          %s108 = scalar_lea.vmem %s0, %s107
          %s109 = smul.u32 2, %s9
        $region20: #{tpu_custom_call.1} parent=15 // pred_fallthru
          _
        // Predicated region
        $region21: #{tpu_custom_call.1} parent=15 // pred_check
          %p110 = pneg %p55
        $region22: #{tpu_custom_call.1} parent=15 // pred_check_branch
          %112 = sbr.rel (%p110) target = $region24
        $region23: #{tpu_custom_call.1} parent=15 // pred_region
          %s113 = smul.u32 2, %s9
          %p114 = scmp.lt.s32.totalorder %s113, 13
          %s115 = scalar_select %p114, %s113, 13
          %s116 = smul.addr %s115, 8
          %s117 = scalar_lea.vmem %s1, %s116
          %s118 = smul.u32 2, %s9
        $region24: #{tpu_custom_call.1} parent=15 // pred_fallthru
          _
      $region16: #{tpu_custom_call.1} parent=5 // pred_fallthru
        _
      %p119 = scmp.le.s32.totalorder 1, %s9
      %p120 = scmp.lt.s32.totalorder %s9, 8
      %p121 = pnand %p119, %p120
      %p122 = pneg %p121
      // Predicated region
      $region25: #{tpu_custom_call.1} parent=5 // pred_check
        _
      $region26: #{tpu_custom_call.1} parent=5 // pred_check_branch
        %124 = sbr.rel (%p121) target = $region28
      $region27: #{tpu_custom_call.1} parent=5 // pred_region
        %s125 = ssub.s32 %s9, 1
        %s126 = smul.u32 2, %s14
        %p127 = scmp.lt.s32.totalorder %s126, 13
        %s128 = scalar_select %p127, %s126, 13
        %s129 = smul.addr %s128, 8
        %s130 = scalar_lea.vmem %s0, %s129
        %p131 = pneg %p35
        %p132 = pneg %p32
        %s133 = smul.u32 2, %s14
        %p134 = scmp.lt.s32.totalorder %s133, 13
        %s135 = scalar_select %p134, %s133, 13
        %s136 = smul.addr %s135, 8
        %s137 = scalar_lea.vmem %s1, %s136
        %p138 = pneg %p61
        %p139 = pneg %p58
        %p140 = pneg %p82
        %p141 = pneg %p79
        %s142 = smul.u32 2, %s14
        %p143 = scmp.lt.s32.totalorder %s142, 13
        %s144 = scalar_select %p143, %s142, 13
        %s145 = smul.addr %s144, 8
        %s146 = scalar_lea.vmem %s0, %s145
        %s147 = smul.u32 2, %s14
        %s148 = smul.u32 2, %s14
        %p149 = scmp.lt.s32.totalorder %s148, 13
        %s150 = scalar_select %p149, %s148, 13
        %s151 = smul.addr %s150, 8
        %s152 = scalar_lea.vmem %s1, %s151
        %s153 = smul.u32 2, %s14
        %p154 = scmp.eq.s32.totalorder %s14, 0
        // Predicated region
        $region29: #{tpu_custom_call.1} parent=27 // pred_check
          %p155 = pneg %p154
        $region30: #{tpu_custom_call.1} parent=27 // pred_check_branch
          %157 = sbr.rel (%p155) target = $region32
        $region31: #{tpu_custom_call.1} parent=27 // pred_region
          %vm158 = vcmask 0
          %159 = vst.msk [vmem:[#allocation2] sm:$0x1] %vm158, 0.0
        $region32: #{tpu_custom_call.1} parent=27 // pred_fallthru
          _
        %v160 = vld [vmem:[%s146] sm:$0xff]
        %v161 = vld [vmem:[%s146 + $0x8] sm:$0xff]
        %v162 = vlog2.pop %v160
        %v163 = vmul.f32 %v162, 0.6931472
        %v164 = vlog2.pop %v161
        %v165 = vmul.f32 %v164, 0.6931472
        %v166 = vld [vmem:[%s152] sm:$0xff]
        %v167 = vld [vmem:[%s152 + $0x8] sm:$0xff]
        %170 = vrot.lane.b32.xlu0 %v166, 120
        %v171 = vpop.permute.xlu0 %170
        %172 = vrot.lane.b32.xlu0 %v167, 120
        %v173 = vpop.permute.xlu0 %172
        %v176 = vadd.f32 %v166, %v171
        %v177 = vadd.f32 %v167, %v173
        %178 = vrot.lane.b32.xlu0 %v166, 112
        %v179 = vpop.permute.xlu0 %178
        %180 = vrot.lane.b32.xlu0 %v167, 112
        %v181 = vpop.permute.xlu0 %180
        %v184 = vadd.f32 %v176, %v179
        %v185 = vadd.f32 %v177, %v181
        %186 = vrot.lane.b32.xlu0 %v166, 104
        %v187 = vpop.permute.xlu0 %186
        %188 = vrot.lane.b32.xlu0 %v167, 104
        %v189 = vpop.permute.xlu0 %188
        %v192 = vadd.f32 %v184, %v187
        %v193 = vadd.f32 %v185, %v189
        %194 = vrot.lane.b32.xlu0 %v166, 96
        %v195 = vpop.permute.xlu0 %194
        %196 = vrot.lane.b32.xlu0 %v167, 96
        %v197 = vpop.permute.xlu0 %196
        %v200 = vadd.f32 %v192, %v195
        %v201 = vadd.f32 %v193, %v197
        %202 = vrot.lane.b32.xlu0 %v166, 88
        %v203 = vpop.permute.xlu0 %202
        %204 = vrot.lane.b32.xlu0 %v167, 88
        %v205 = vpop.permute.xlu0 %204
        %v208 = vadd.f32 %v200, %v203
        %v209 = vadd.f32 %v201, %v205
        %210 = vrot.lane.b32.xlu0 %v166, 80
        %v211 = vpop.permute.xlu0 %210
        %212 = vrot.lane.b32.xlu0 %v167, 80
        %v213 = vpop.permute.xlu0 %212
        %v216 = vadd.f32 %v208, %v211
        %v217 = vadd.f32 %v209, %v213
        %218 = vrot.lane.b32.xlu0 %v166, 72
        %v219 = vpop.permute.xlu0 %218
        %220 = vrot.lane.b32.xlu0 %v167, 72
        %v221 = vpop.permute.xlu0 %220
        %v224 = vadd.f32 %v216, %v219
        %v225 = vadd.f32 %v217, %v221
        %v226 = vld [vmem:[#allocation2] sm:$0x1]
        %v227 = vmul.f32 %v224, %v163
        %v228 = vmul.f32 %v225, %v165
        %vm229 = vcmask 64512
        %v230 = vsel %vm229, %v227, 0.0
        %v231 = vsel %vm229, %v228, 0.0
        %v232 = vadd.f32 %v230, %v231
        %233 = vadd.xlane.f32.xlu0 %v232
        %v234 = vpop.xlane.xlu0 %233
        %v235 = vrot.slane %v234, 4
        %v236 = vadd.f32 %v234, %v235
        %v237 = vrot.slane %v236, 2
        %v238 = vadd.f32 %v236, %v237
        %v239 = vrot.slane %v238, 1
        %v240 = vadd.f32 %v238, %v239
        %s241 = vtos %v240
        %v242 = vstv %s241
        %v243 = vadd.f32 %v226, %v242
        %vm244 = vcmask 0
        %245 = vst.msk [vmem:[#allocation2] sm:$0x1] %vm244, %v243
        %p246 = scmp.eq.s32.totalorder %s14, 6
        // Predicated region
        $region33: #{tpu_custom_call.1} parent=27 // pred_check
          %p247 = pneg %p246
        $region34: #{tpu_custom_call.1} parent=27 // pred_check_branch
          %249 = sbr.rel (%p247) target = $region36
        $region35: #{tpu_custom_call.1} parent=27 // pred_region
          %v250 = vld [vmem:[#allocation2] sm:$0x1]
          %v251 = vsub.f32 0.0, %v250
          %v252 = vmul.f32 %v251, 0.01
          %253 = vst.msk [vmem:[#allocation3] sm:$0x1] %vm244, %v252
        $region36: #{tpu_custom_call.1} parent=27 // pred_fallthru
          _
        // Predicated region
        $region37: #{tpu_custom_call.1} parent=27 // pred_check
          %p254 = pneg %p79
        $region38: #{tpu_custom_call.1} parent=27 // pred_check_branch
          %256 = sbr.rel (%p254) target = $region40
        $region39: #{tpu_custom_call.1} parent=27 // pred_region
          %s258 = ssub.s32 16, 16
          %259 = vsyncadd [#allocation4], %s258
          %s261 = sshll.u32 [#allocation3], 4
          %s262 = int_to_ptr.vmem [resolvable:$true] %s261
          %264 = dma.vmem_to_hbm [thread:$0]  %s262, 16, %s2, [#allocation4]
        $region40: #{tpu_custom_call.1} parent=27 // pred_fallthru
          _
        // Predicated region
        $region41: #{tpu_custom_call.1} parent=27 // pred_check
          %p265 = pneg %p79
        $region42: #{tpu_custom_call.1} parent=27 // pred_check_branch
          %267 = sbr.rel (%p265) target = $region44
        $region43: #{tpu_custom_call.1} parent=27 // pred_region
          %268 = dma.done [#allocation4], 16
        $region44: #{tpu_custom_call.1} parent=27 // pred_fallthru
          _
      $region28: #{tpu_custom_call.1} parent=5 // pred_fallthru
        _
      %p269 = scmp.le.s32.totalorder 2, %s9
      // Predicated region
      $region45: #{tpu_custom_call.1} parent=5 // pred_check
        %p270 = pneg %p269
      $region46: #{tpu_custom_call.1} parent=5 // pred_check_branch
        %272 = sbr.rel (%p270) target = $region48
      $region47: #{tpu_custom_call.1} parent=5 // pred_region
        %s273 = ssub.s32 %s9, 2
      $region48: #{tpu_custom_call.1} parent=5 // pred_fallthru
        _
    $region6: #{tpu_custom_call.1} parent=1 // loop_footer
      %s13 = sadd.s32 1, %s9
    $region7: #{tpu_custom_call.1} parent=1 // loop_footer_branch
      %8 = sbr.rel target = $region3
    $region8: #{tpu_custom_call.1} parent=1 // loop_exit
      _
    %274 = vsyncpa [#allocation4], 1
    %s275 = scalar_lea.sflag [#allocation4], 1
    %276 = vsyncpa %s275, 1

</llo_original>
